<compile_context>
chip_gen: v7x
topology: tpu7x:2x2x1
jax: 0.10.0
libtpu: 0.0.40
codegen_flags: <defaults>
</compile_context>

<pallas_src>
import math
import functools

import jax
import jax.numpy as jnp
from jax import lax
from jax.experimental import pallas as pl
from jax.experimental.pallas import tpu as pltpu


_LANES = 128
_SUBLANES = 8          # f32 sublane tile


def _round_up(x, m):
    return ((x + m - 1) // m) * m


def _largest_divisor_leq(n, k):
    k = max(1, min(n, k))
    while n % k:
        k -= 1
    return k


def _vmem_capacity_bytes():
    """Physical VMEM per TensorCore; conservative 64 MiB (v7x) fallback."""
    try:
        info = pltpu.get_tpu_info()
        cap = getattr(info, "vmem_capacity_bytes", None)
        if cap:
            return int(cap)
    except Exception:
        pass
    return 64 * 1024 * 1024


def _vmem_footprint(block_b, block_sq, skv_s, d_in, d_qk_p, d_v_p,
                    mxu_bytes, attn_bytes):
    """Rough per-step VMEM estimate (pipelined blocks + scratch + live values)."""
    f32 = 4
    q_blk = 2 * block_b * block_sq * d_in * f32            # double-buffered
    kv_blk = 2 * 2 * block_b * skv_s * d_in * f32
    out_blk = 2 * block_b * block_sq * d_v_p * f32
    attn_blk = 2 * block_b * block_sq * skv_s * attn_bytes
    weights = d_in * (2 * d_qk_p + d_v_p) * mxu_bytes + (2 * d_qk_p + d_v_p) * f32
    scratch = block_b * skv_s * (d_qk_p + d_v_p) * mxu_bytes
    live = max(3 * block_b * block_sq * skv_s * f32
               + block_b * block_sq * d_qk_p * f32,
               2 * block_b * skv_s * (d_qk_p + d_v_p) * f32)
    return q_blk + kv_blk + out_blk + attn_blk + weights + scratch + live


def _self_attention_kernel(q_ref, k_ref, v_ref,
                           wq_ref, wk_ref, wv_ref,
                           bq_ref, bk_ref, bv_ref,
                           out_ref, attn_ref,
                           k_scr, v_scr,
                           *, d_qk, skv_valid, mxu_dtype):
    bblk, bsq, d_in = q_ref.shape
    _, skv_s, _ = k_ref.shape
    d_qk_p = wq_ref.shape[1]
    d_v_p = wv_ref.shape[1]

    # ---- K/V projections: once per batch block (first Sq tile), then reused -------
    @pl.when(pl.program_id(1) == 0)
    def _():
        k2 = k_ref[...].reshape(bblk * skv_s, d_in).astype(mxu_dtype)
        v2 = v_ref[...].reshape(bblk * skv_s, d_in).astype(mxu_dtype)
        K = jnp.dot(k2, wk_ref[...], preferred_element_type=jnp.float32) + bk_ref[...]
        V = jnp.dot(v2, wv_ref[...], preferred_element_type=jnp.float32) + bv_ref[...]
        k_scr[...] = K.reshape(bblk, skv_s, d_qk_p).astype(k_scr.dtype)
        v_scr[...] = V.reshape(bblk, skv_s, d_v_p).astype(v_scr.dtype)

    # ---- Q projection for this (batch, Sq) tile ------------------------------------
    # 1/sqrt(d_qk) is folded into Q (small tensor) instead of scores (large).
    scale = 1.0 / math.sqrt(d_qk)
    q2 = q_ref[...].reshape(bblk * bsq, d_in).astype(mxu_dtype)
    Q = (jnp.dot(q2, wq_ref[...], preferred_element_type=jnp.float32)
         + bq_ref[...]) * scale
    Qb = Q.reshape(bblk, bsq, d_qk_p).astype(mxu_dtype)

    # ---- Scaled dot-product scores (batched contraction; no K^T materialization) ---
    scores = lax.dot_general(
        Qb, k_scr[...],
        dimension_numbers=(((2,), (2,)), ((0,), (0,))),
        preferred_element_type=jnp.float32)            # (bblk, bsq, skv_s)

    # Mask key positions that only exist because of sublane padding of Skv.
    if skv_valid != skv_s:                             # static Python check
        kidx = lax.broadcasted_iota(jnp.int32, (1, 1, skv_s), 2)
        scores = jnp.where(kidx < skv_valid, scores, -1e30)

    # ---- Numerically-stable softmax over keys --------------------------------------
    m = jnp.max(scores, axis=-1, keepdims=True)
    e = jnp.exp(scores - m)
    denom = jnp.sum(e, axis=-1, keepdims=True)
    # Exact reciprocal: the attention weights are a kernel output and must sum to 1.
    attn = e * pl.reciprocal(denom, approx=False)

    # ---- Weighted sum of values -----------------------------------------------------
    ctx = lax.dot_general(
        attn.astype(mxu_dtype), v_scr[...],
        dimension_numbers=(((2,), (1,)), ((0,), (0,))),
        preferred_element_type=jnp.float32)            # (bblk, bsq, d_v_p)

    out_ref[...] = ctx.astype(out_ref.dtype)
    attn_ref[...] = attn.astype(attn_ref.dtype)


def self_attention(query, key, value, wq, wk, wv, bq, bk, bv, *,
                   block_b=None, block_sq=None,
                   mxu_dtype=jnp.bfloat16, attn_dtype=jnp.float32):
    """query: (B, Sq, d_in); key/value: (B, Skv, d_in); weights (d_in, d_out); biases (1, d_out).

    Returns (output (B, Sq, d_v), attention_weights (B, Sq, Skv))."""
    B, Sq, d_in = query.shape
    _, Skv, _ = key.shape
    d_qk = wq.shape[1]
    d_v = wv.shape[1]

    d_qk_p = _round_up(d_qk, _LANES)       # lane-dense projection outputs
    d_v_p = _round_up(d_v, _LANES)
    Skv_s = _round_up(Skv, _SUBLANES)      # sublane-only padding of K/V rows
    Sq_s = _round_up(Sq, _SUBLANES)

    def pad_cols(a, to):
        if a.shape[-1] == to:
            return a
        return jnp.pad(a, [(0, 0)] * (a.ndim - 1) + [(0, to - a.shape[-1])])

    # Weights are cast to the MXU operand dtype once in the wrapper (tiny arrays);
    # biases stay f32 (added to the f32 accumulator).
    wq_p = pad_cols(wq, d_qk_p).astype(mxu_dtype)
    wk_p = pad_cols(wk, d_qk_p).astype(mxu_dtype)
    wv_p = pad_cols(wv, d_v_p).astype(mxu_dtype)
    bq_p = pad_cols(bq, d_qk_p)
    bk_p = pad_cols(bk, d_qk_p)
    bv_p = pad_cols(bv, d_v_p)

    if Skv_s != Skv:
        key = jnp.pad(key, ((0, 0), (0, Skv_s - Skv), (0, 0)))
        value = jnp.pad(value, ((0, 0), (0, Skv_s - Skv), (0, 0)))

    # ---- Tile sizing -----------------------------------------------------------------
    if block_sq is None:
        block_sq = min(Sq_s, 256)
    block_sq = max(_SUBLANES, _round_up(min(block_sq, Sq_s), _SUBLANES))

    if block_b is None:
        # Target ~256 packed MXU rows for the Q projection (v6e/v7x MXU is 256x256).
        block_b = max(1, -(-256 // block_sq))
    block_b = _largest_divisor_leq(B, block_b)
    # v7x has 2 TensorCores: keep >= 2 steps on the "parallel" batch axis if possible.
    if B > 1 and B // block_b < 2:
        block_b = _largest_divisor_leq(B, max(1, block_b // 2))

    mxu_bytes = jnp.dtype(mxu_dtype).itemsize
    attn_bytes = jnp.dtype(attn_dtype).itemsize
    cap = _vmem_capacity_bytes()
    budget = int(cap * 0.55)               # leave headroom for compiler scratch
    vmem_limit = int(cap * 0.75)           # ~96 MiB on v5e/v6e, ~48 MiB on v7x

    def fits(bb, bs):
        return _vmem_footprint(bb, bs, Skv_s, d_in, d_qk_p, d_v_p,
                               mxu_bytes, attn_bytes) <= budget

    while not fits(block_b, block_sq):
        if block_b > 1:
            block_b = _largest_divisor_leq(B, block_b - 1)
        elif block_sq > _SUBLANES:
            block_sq = max(_SUBLANES, _round_up(block_sq // 2, _SUBLANES))
        else:
            break  # TODO(synk): needs KV tiling + online softmax for huge Skv.

    Sq_p = _round_up(Sq_s, block_sq)
    if Sq_p != Sq:
        query = jnp.pad(query, ((0, 0), (0, Sq_p - Sq), (0, 0)))

    grid = (B // block_b, Sq_p // block_sq)

    kernel = functools.partial(_self_attention_kernel,
                               d_qk=d_qk, skv_valid=Skv, mxu_dtype=mxu_dtype)

    def const_spec(shape):
        # Constant-index inputs: single VMEM buffer (no pointless double-buffering).
        idx = lambda b, s: (0,) * len(shape)
        try:
            return pl.BlockSpec(shape, idx, pipeline_mode=pl.Buffered(1))
        except Exception:
            return pl.BlockSpec(shape, idx)

    out_p, attn_p = pl.pallas_call(
        kernel,
        out_shape=(
            jax.ShapeDtypeStruct((B, Sq_p, d_v_p), query.dtype),
            jax.ShapeDtypeStruct((B, Sq_p, Skv_s), attn_dtype),
        ),
        grid_spec=pltpu.PrefetchScalarGridSpec(
            num_scalar_prefetch=0,
            grid=grid,
            in_specs=[
                pl.BlockSpec((block_b, block_sq, d_in), lambda b, s: (b, s, 0)),  # query
                pl.BlockSpec((block_b, Skv_s, d_in), lambda b, s: (b, 0, 0)),     # key
                pl.BlockSpec((block_b, Skv_s, d_in), lambda b, s: (b, 0, 0)),     # value
                const_spec((d_in, d_qk_p)),                                       # Wq
                const_spec((d_in, d_qk_p)),                                       # Wk
                const_spec((d_in, d_v_p)),                                        # Wv
                const_spec((1, d_qk_p)),                                          # bq
                const_spec((1, d_qk_p)),                                          # bk
                const_spec((1, d_v_p)),                                           # bv
            ],
            out_specs=[
                pl.BlockSpec((block_b, block_sq, d_v_p), lambda b, s: (b, s, 0)),
                pl.BlockSpec((block_b, block_sq, Skv_s), lambda b, s: (b, s, 0)),
            ],
            scratch_shapes=[
                pltpu.VMEM((block_b, Skv_s, d_qk_p), mxu_dtype),   # projected K
                pltpu.VMEM((block_b, Skv_s, d_v_p), mxu_dtype),    # projected V
            ],
        ),
        compiler_params=pltpu.CompilerParams(
            dimension_semantics=("parallel", "arbitrary"),
            vmem_limit_bytes=vmem_limit,
        ),
    )(query, key, value, wq_p, wk_p, wv_p, bq_p, bk_p, bv_p)

    out, attn = out_p, attn_p
    if Sq_p != Sq or d_v_p != d_v:
        out = out[:, :Sq, :d_v]
    if Sq_p != Sq or Skv_s != Skv:
        attn = attn[:, :Sq, :Skv]
    return out, attn


def _xavier_uniform(rng, fan_in, fan_out):
    # Matches nn.init.xavier_uniform_ on a (fan_out, fan_in) Linear weight;
    # stored transposed (d_in, d_out) for X @ W.
    bound = math.sqrt(6.0 / (fan_in + fan_out))
    return jax.random.uniform(rng, (fan_in, fan_out), jnp.float32, -bound, bound)


def _linear_bias(rng, fan_in, fan_out):
    # PyTorch nn.Linear default bias init: U(-1/sqrt(fan_in), 1/sqrt(fan_in))
    bound = 1.0 / math.sqrt(fan_in)
    return jax.random.uniform(rng, (1, fan_out), jnp.float32, -bound, bound)


if __name__ == "__main__":
    # Small shapes consistent with the module's forward contract.
    B, Sq, Skv = 2, 8, 8
    d_in, d_qk, d_v = 32, 16, 16

    root = jax.random.PRNGKey(0)
    kq, kk, kv_, kwq, kwk, kwv, kbq, kbk, kbv = jax.random.split(root, 9)

    query = jax.random.normal(kq, (B, Sq, d_in), jnp.float32)
    key = jax.random.normal(kk, (B, Skv, d_in), jnp.float32)
    value = jax.random.normal(kv_, (B, Skv, d_in), jnp.float32)

    wq = _xavier_uniform(kwq, d_in, d_qk)
    wk = _xavier_uniform(kwk, d_in, d_qk)
    wv = _xavier_uniform(kwv, d_in, d_v)
    bq = _linear_bias(kbq, d_in, d_qk)
    bk = _linear_bias(kbk, d_in, d_qk)
    bv = _linear_bias(kbv, d_in, d_v)

    # Pure-JAX full-precision reference.
    Qr = jnp.einsum("bsd,de->bse", query, wq, precision="highest") + bq
    Kr = jnp.einsum("bsd,de->bse", key, wk, precision="highest") + bk
    Vr = jnp.einsum("bsd,de->bse", value, wv, precision="highest") + bv
    scores_r = jnp.einsum("bqd,bkd->bqk", Qr, Kr, precision="highest") / math.sqrt(d_qk)
    attn_r = jax.nn.softmax(scores_r, axis=-1)
    out_r = jnp.einsum("bqk,bkd->bqd", attn_r, Vr, precision="highest")

    # Default fast path: bf16 MXU operands, f32 accumulation (loose tolerance).
    out, attn = self_attention(query, key, value, wq, wk, wv, bq, bk, bv)
    jax.block_until_ready((out, attn))
    assert out.shape == (B, Sq, d_v) and attn.shape == (B, Sq, Skv)
    assert jnp.allclose(jnp.sum(attn, axis=-1), 1.0, atol=1e-3)   # exact reciprocal
    assert jnp.allclose(out, out_r, atol=5e-2, rtol=5e-2)
    assert jnp.allclose(attn, attn_r, atol=3e-2, rtol=3e-2)

    # Full-f32 MXU path (numerics parity option).
    out32, attn32 = self_attention(query, key, value, wq, wk, wv, bq, bk, bv,
                                   mxu_dtype=jnp.float32)
    jax.block_until_ready((out32, attn32))
    assert jnp.allclose(out32, out_r, atol=2e-2, rtol=2e-2)
    assert jnp.allclose(attn32, attn_r, atol=2e-2, rtol=2e-2)

    print("KERNEL_OK")
</pallas_src>

<mosaic_0001>
module attributes {stable_mosaic.version = 11 : i64} {
  func.func @_self_attention_kernel(%arg0: i32, %arg1: i32, %arg2: memref<1x8x32xf32, #tpu.memory_space<vmem>>, %arg3: memref<1x8x32xf32, #tpu.memory_space<vmem>>, %arg4: memref<1x8x32xf32, #tpu.memory_space<vmem>>, %arg5: memref<32x128xbf16, #tpu.memory_space<vmem>>, %arg6: memref<32x128xbf16, #tpu.memory_space<vmem>>, %arg7: memref<32x128xbf16, #tpu.memory_space<vmem>>, %arg8: memref<1x128xf32, #tpu.memory_space<vmem>>, %arg9: memref<1x128xf32, #tpu.memory_space<vmem>>, %arg10: memref<1x128xf32, #tpu.memory_space<vmem>>, %arg11: memref<1x8x128xf32, #tpu.memory_space<vmem>>, %arg12: memref<1x8x8xf32, #tpu.memory_space<vmem>>, %arg13: memref<1x8x128xbf16, #tpu.memory_space<vmem>>, %arg14: memref<1x8x128xbf16, #tpu.memory_space<vmem>>) attributes {dimension_semantics = [#tpu.dimension_semantics<parallel>, #tpu.dimension_semantics<arbitrary>], iteration_bounds = array<i64: 2, 1>, scalar_prefetch = 0 : i64, scratch_operands = 2 : i64, tpu.core_type = #tpu.core_type<tc>, window_params = [{transform_indices = @transform_0, window_bounds = array<i64: 1, 8, 32>}, {transform_indices = @transform_1, window_bounds = array<i64: 1, 8, 32>}, {transform_indices = @transform_2, window_bounds = array<i64: 1, 8, 32>}, {pipeline_mode = #tpu.pipeline_mode<synchronous>, transform_indices = @transform_3, window_bounds = array<i64: 32, 128>}, {pipeline_mode = #tpu.pipeline_mode<synchronous>, transform_indices = @transform_4, window_bounds = array<i64: 32, 128>}, {pipeline_mode = #tpu.pipeline_mode<synchronous>, transform_indices = @transform_5, window_bounds = array<i64: 32, 128>}, {pipeline_mode = #tpu.pipeline_mode<synchronous>, transform_indices = @transform_6, window_bounds = array<i64: 1, 128>}, {pipeline_mode = #tpu.pipeline_mode<synchronous>, transform_indices = @transform_7, window_bounds = array<i64: 1, 128>}, {pipeline_mode = #tpu.pipeline_mode<synchronous>, transform_indices = @transform_8, window_bounds = array<i64: 1, 128>}, {transform_indices = @transform_9, window_bounds = array<i64: 1, 8, 128>}, {transform_indices = @transform_10, window_bounds = array<i64: 1, 8, 8>}]} {
    %c0_i32 = arith.constant 0 : i32
    %0 = arith.cmpi eq, %arg1, %c0_i32 : i32
    %1 = arith.extui %0 : i1 to i32
    %c0_i32_0 = arith.constant 0 : i32
    %2 = arith.cmpi ne, %1, %c0_i32_0 : i32
    scf.if %2 {
      %c0_24 = arith.constant 0 : index
      %c0_25 = arith.constant 0 : index
      %c0_26 = arith.constant 0 : index
      %32 = vector.load %arg3[%c0_24, %c0_25, %c0_26] : memref<1x8x32xf32, #tpu.memory_space<vmem>>, vector<1x8x32xf32>
      %33 = vector.shape_cast %32 : vector<1x8x32xf32> to vector<8x32xf32>
      %34 = arith.truncf %33 : vector<8x32xf32> to vector<8x32xbf16>
      %c0_27 = arith.constant 0 : index
      %c0_28 = arith.constant 0 : index
      %c0_29 = arith.constant 0 : index
      %35 = vector.load %arg4[%c0_27, %c0_28, %c0_29] : memref<1x8x32xf32, #tpu.memory_space<vmem>>, vector<1x8x32xf32>
      %36 = vector.shape_cast %35 : vector<1x8x32xf32> to vector<8x32xf32>
      %37 = arith.truncf %36 : vector<8x32xf32> to vector<8x32xbf16>
      %c0_30 = arith.constant 0 : index
      %c0_31 = arith.constant 0 : index
      %38 = vector.load %arg6[%c0_30, %c0_31] : memref<32x128xbf16, #tpu.memory_space<vmem>>, vector<32x128xbf16>
      %cst_32 = arith.constant dense<0.000000e+00> : vector<8x128xf32>
      %39 = tpu.matmul %34, %38, %cst_32 {dimension_numbers = #tpu.dot_dimension_numbers<[1], [0], [0], [1], [0, 0, 1, 1], [], []>} : vector<8x32xbf16>, vector<32x128xbf16>, vector<8x128xf32> -> vector<8x128xf32>
      %c0_33 = arith.constant 0 : index
      %c0_34 = arith.constant 0 : index
      %40 = vector.load %arg9[%c0_33, %c0_34] : memref<1x128xf32, #tpu.memory_space<vmem>>, vector<1x128xf32>
      %41 = vector.broadcast %40 : vector<1x128xf32> to vector<8x128xf32>
      %42 = arith.addf %39, %41 : vector<8x128xf32>
      %c0_35 = arith.constant 0 : index
      %c0_36 = arith.constant 0 : index
      %43 = vector.load %arg7[%c0_35, %c0_36] : memref<32x128xbf16, #tpu.memory_space<vmem>>, vector<32x128xbf16>
      %cst_37 = arith.constant dense<0.000000e+00> : vector<8x128xf32>
      %44 = tpu.matmul %37, %43, %cst_37 {dimension_numbers = #tpu.dot_dimension_numbers<[1], [0], [0], [1], [0, 0, 1, 1], [], []>} : vector<8x32xbf16>, vector<32x128xbf16>, vector<8x128xf32> -> vector<8x128xf32>
      %c0_38 = arith.constant 0 : index
      %c0_39 = arith.constant 0 : index
      %45 = vector.load %arg10[%c0_38, %c0_39] : memref<1x128xf32, #tpu.memory_space<vmem>>, vector<1x128xf32>
      %46 = vector.broadcast %45 : vector<1x128xf32> to vector<8x128xf32>
      %47 = arith.addf %44, %46 : vector<8x128xf32>
      %48 = vector.shape_cast %42 : vector<8x128xf32> to vector<1x8x128xf32>
      %49 = arith.truncf %48 : vector<1x8x128xf32> to vector<1x8x128xbf16>
      %c0_40 = arith.constant 0 : index
      %c0_41 = arith.constant 0 : index
      %c0_42 = arith.constant 0 : index
      %50 = vector.load %arg13[%c0_40, %c0_41, %c0_42] : memref<1x8x128xbf16, #tpu.memory_space<vmem>>, vector<1x8x128xbf16>
      tpu.vector_store %arg13[%c0_40, %c0_41, %c0_42], %49 {strides = array<i32>} : memref<1x8x128xbf16, #tpu.memory_space<vmem>>, vector<1x8x128xbf16>,
      %51 = vector.shape_cast %47 : vector<8x128xf32> to vector<1x8x128xf32>
      %52 = arith.truncf %51 : vector<1x8x128xf32> to vector<1x8x128xbf16>
      %c0_43 = arith.constant 0 : index
      %c0_44 = arith.constant 0 : index
      %c0_45 = arith.constant 0 : index
      %53 = vector.load %arg14[%c0_43, %c0_44, %c0_45] : memref<1x8x128xbf16, #tpu.memory_space<vmem>>, vector<1x8x128xbf16>
      tpu.vector_store %arg14[%c0_43, %c0_44, %c0_45], %52 {strides = array<i32>} : memref<1x8x128xbf16, #tpu.memory_space<vmem>>, vector<1x8x128xbf16>,
    } else {
    }
    %c0 = arith.constant 0 : index
    %c0_1 = arith.constant 0 : index
    %c0_2 = arith.constant 0 : index
    %3 = vector.load %arg2[%c0, %c0_1, %c0_2] : memref<1x8x32xf32, #tpu.memory_space<vmem>>, vector<1x8x32xf32>
    %4 = vector.shape_cast %3 : vector<1x8x32xf32> to vector<8x32xf32>
    %5 = arith.truncf %4 : vector<8x32xf32> to vector<8x32xbf16>
    %c0_3 = arith.constant 0 : index
    %c0_4 = arith.constant 0 : index
    %6 = vector.load %arg5[%c0_3, %c0_4] : memref<32x128xbf16, #tpu.memory_space<vmem>>, vector<32x128xbf16>
    %cst = arith.constant dense<0.000000e+00> : vector<8x128xf32>
    %7 = tpu.matmul %5, %6, %cst {dimension_numbers = #tpu.dot_dimension_numbers<[1], [0], [0], [1], [0, 0, 1, 1], [], []>} : vector<8x32xbf16>, vector<32x128xbf16>, vector<8x128xf32> -> vector<8x128xf32>
    %c0_5 = arith.constant 0 : index
    %c0_6 = arith.constant 0 : index
    %8 = vector.load %arg8[%c0_5, %c0_6] : memref<1x128xf32, #tpu.memory_space<vmem>>, vector<1x128xf32>
    %9 = vector.broadcast %8 : vector<1x128xf32> to vector<8x128xf32>
    %10 = arith.addf %7, %9 : vector<8x128xf32>
    %cst_7 = arith.constant 2.500000e-01 : f32
    %11 = vector.broadcast %cst_7 : f32 to vector<8x128xf32>
    %12 = arith.mulf %10, %11 : vector<8x128xf32>
    %13 = vector.shape_cast %12 : vector<8x128xf32> to vector<1x8x128xf32>
    %14 = arith.truncf %13 : vector<1x8x128xf32> to vector<1x8x128xbf16>
    %c0_8 = arith.constant 0 : index
    %c0_9 = arith.constant 0 : index
    %c0_10 = arith.constant 0 : index
    %15 = vector.load %arg13[%c0_8, %c0_9, %c0_10] : memref<1x8x128xbf16, #tpu.memory_space<vmem>>, vector<1x8x128xbf16>
    %cst_11 = arith.constant dense<0.000000e+00> : vector<1x8x8xf32>
    %16 = tpu.matmul %14, %15, %cst_11 {dimension_numbers = #tpu.dot_dimension_numbers<[2], [2], [1], [1], [0, 0, 0, 1, 1, 1], [0], [0]>} : vector<1x8x128xbf16>, vector<1x8x128xbf16>, vector<1x8x8xf32> -> vector<1x8x8xf32>
    %cst_12 = arith.constant dense<0xFF800000> : vector<1x8xf32>
    %17 = vector.multi_reduction <maximumf>, %16, %cst_12 [2] : vector<1x8x8xf32> to vector<1x8xf32>
    %18 = vector.shape_cast %17 : vector<1x8xf32> to vector<1x8x1xf32>
    %19 = vector.broadcast %18 : vector<1x8x1xf32> to vector<1x8x8xf32>
    %20 = arith.subf %16, %19 : vector<1x8x8xf32>
    %21 = math.exp %20 : vector<1x8x8xf32>
    %cst_13 = arith.constant dense<0.000000e+00> : vector<1x8xf32>
    %22 = vector.multi_reduction <add>, %21, %cst_13 [2] : vector<1x8x8xf32> to vector<1x8xf32>
    %23 = vector.shape_cast %22 : vector<1x8xf32> to vector<1x8x1xf32>
    %24 = tpu.reciprocal %23 : vector<1x8x1xf32> -> vector<1x8x1xf32>
    %25 = vector.broadcast %24 : vector<1x8x1xf32> to vector<1x8x8xf32>
    %26 = arith.mulf %21, %25 : vector<1x8x8xf32>
    %27 = arith.truncf %26 : vector<1x8x8xf32> to vector<1x8x8xbf16>
    %c0_14 = arith.constant 0 : index
    %c0_15 = arith.constant 0 : index
    %c0_16 = arith.constant 0 : index
    %28 = vector.load %arg14[%c0_14, %c0_15, %c0_16] : memref<1x8x128xbf16, #tpu.memory_space<vmem>>, vector<1x8x128xbf16>
    %cst_17 = arith.constant dense<0.000000e+00> : vector<1x8x128xf32>
    %29 = tpu.matmul %27, %28, %cst_17 {dimension_numbers = #tpu.dot_dimension_numbers<[2], [1], [1], [2], [0, 0, 0, 1, 1, 2], [0], [0]>} : vector<1x8x8xbf16>, vector<1x8x128xbf16>, vector<1x8x128xf32> -> vector<1x8x128xf32>
    %c0_18 = arith.constant 0 : index
    %c0_19 = arith.constant 0 : index
    %c0_20 = arith.constant 0 : index
    %30 = vector.load %arg11[%c0_18, %c0_19, %c0_20] : memref<1x8x128xf32, #tpu.memory_space<vmem>>, vector<1x8x128xf32>
    tpu.vector_store %arg11[%c0_18, %c0_19, %c0_20], %29 {strides = array<i32>} : memref<1x8x128xf32, #tpu.memory_space<vmem>>, vector<1x8x128xf32>,
    %c0_21 = arith.constant 0 : index
    %c0_22 = arith.constant 0 : index
    %c0_23 = arith.constant 0 : index
    %31 = vector.load %arg12[%c0_21, %c0_22, %c0_23] : memref<1x8x8xf32, #tpu.memory_space<vmem>>, vector<1x8x8xf32>
    tpu.vector_store %arg12[%c0_21, %c0_22, %c0_23], %26 {strides = array<i32>} : memref<1x8x8xf32, #tpu.memory_space<vmem>>, vector<1x8x8xf32>,
    return
  }
  func.func @transform_0(%arg0: i32, %arg1: i32) -> (i32, i32, i32) {
    %c0_i32 = arith.constant 0 : i32
    %c0_i32_0 = arith.constant 0 : i32
    return %arg0, %arg1, %c0_i32 : i32, i32, i32
  }
  func.func @transform_1(%arg0: i32, %arg1: i32) -> (i32, i32, i32) {
    %c0_i32 = arith.constant 0 : i32
    %c0_i32_0 = arith.constant 0 : i32
    %c0_i32_1 = arith.constant 0 : i32
    return %arg0, %c0_i32, %c0_i32_0 : i32, i32, i32
  }
  func.func @transform_2(%arg0: i32, %arg1: i32) -> (i32, i32, i32) {
    %c0_i32 = arith.constant 0 : i32
    %c0_i32_0 = arith.constant 0 : i32
    %c0_i32_1 = arith.constant 0 : i32
    return %arg0, %c0_i32, %c0_i32_0 : i32, i32, i32
  }
  func.func @transform_3(%arg0: i32, %arg1: i32) -> (i32, i32) {
    %c0_i32 = arith.constant 0 : i32
    %c0_i32_0 = arith.constant 0 : i32
    %c0_i32_1 = arith.constant 0 : i32
    return %c0_i32, %c0_i32_0 : i32, i32
  }
  func.func @transform_4(%arg0: i32, %arg1: i32) -> (i32, i32) {
    %c0_i32 = arith.constant 0 : i32
    %c0_i32_0 = arith.constant 0 : i32
    %c0_i32_1 = arith.constant 0 : i32
    return %c0_i32, %c0_i32_0 : i32, i32
  }
  func.func @transform_5(%arg0: i32, %arg1: i32) -> (i32, i32) {
    %c0_i32 = arith.constant 0 : i32
    %c0_i32_0 = arith.constant 0 : i32
    %c0_i32_1 = arith.constant 0 : i32
    return %c0_i32, %c0_i32_0 : i32, i32
  }
  func.func @transform_6(%arg0: i32, %arg1: i32) -> (i32, i32) {
    %c0_i32 = arith.constant 0 : i32
    %c0_i32_0 = arith.constant 0 : i32
    %c0_i32_1 = arith.constant 0 : i32
    return %c0_i32, %c0_i32_0 : i32, i32
  }
  func.func @transform_7(%arg0: i32, %arg1: i32) -> (i32, i32) {
    %c0_i32 = arith.constant 0 : i32
    %c0_i32_0 = arith.constant 0 : i32
    %c0_i32_1 = arith.constant 0 : i32
    return %c0_i32, %c0_i32_0 : i32, i32
  }
  func.func @transform_8(%arg0: i32, %arg1: i32) -> (i32, i32) {
    %c0_i32 = arith.constant 0 : i32
    %c0_i32_0 = arith.constant 0 : i32
    %c0_i32_1 = arith.constant 0 : i32
    return %c0_i32, %c0_i32_0 : i32, i32
  }
  func.func @transform_9(%arg0: i32, %arg1: i32) -> (i32, i32, i32) {
    %c0_i32 = arith.constant 0 : i32
    %c0_i32_0 = arith.constant 0 : i32
    return %arg0, %arg1, %c0_i32 : i32, i32, i32
  }
  func.func @transform_10(%arg0: i32, %arg1: i32) -> (i32, i32, i32) {
    %c0_i32 = arith.constant 0 : i32
    %c0_i32_0 = arith.constant 0 : i32
    return %arg0, %arg1, %c0_i32 : i32, i32, i32
  }
}

</mosaic_0001>

<llo_original>
// kernel: tpu_custom_call.1
$region0: #{tpu_custom_call.1}
  #allocation0 [shape = 'u32[]', space=smem, size = 0x4, offset = 0x4, fixed_abs, tag = 'smem constant byte address 0x4 - core index']
  #allocation1 [shape = 'u32[144,128]{1,0:T(1,128)}', space=vmem, size = 0x12000, scoped, tag = 'internal scratch']
  #allocation2 [shape = 'bf16[1,8,128]{2,1,0:T(8,128)(2,1)}', space=vmem, size = 0x800, scoped, tag = 'scratch operand']
  #allocation3 [shape = 'bf16[1,8,128]{2,1,0:T(8,128)(2,1)}', space=vmem, size = 0x800, scoped, tag = 'scratch operand']
  %s0 = inlined_call_operand.hbm [shape: f32[2,8,32], index: 0, kind: input, shape index: {}]
  %s1 = inlined_call_operand.hbm [shape: f32[2,8,32], index: 1, kind: input, shape index: {}]
  %s2 = inlined_call_operand.hbm [shape: f32[2,8,32], index: 2, kind: input, shape index: {}]
  %s3 = inlined_call_operand.hbm [shape: bf16[32,128], index: 3, kind: input, shape index: {}]
  %s4 = inlined_call_operand.hbm [shape: bf16[32,128], index: 4, kind: input, shape index: {}]
  %s5 = inlined_call_operand.vmem [shape: bf16[32,128], index: 5, kind: input, shape index: {}]
  %s6 = inlined_call_operand.vmem [shape: f32[1,128], index: 6, kind: input, shape index: {}]
  %s7 = inlined_call_operand.vmem [shape: f32[1,128], index: 7, kind: input, shape index: {}]
  %s8 = inlined_call_operand.vmem [shape: f32[1,128], index: 8, kind: input, shape index: {}]
  %s9 = inlined_call_operand.hbm [shape: f32[2,8,128], index: 9, kind: output, shape index: {0}]
  %s10 = inlined_call_operand.hbm [shape: f32[2,8,8], index: 10, kind: output, shape index: {1}]
  %11 = xla_tuple %s9, %s10
  %s12 = sld [smem:[#allocation0]]
  $region101: #{tpu_custom_call.1} parent=0
    _
  %s14 = ssub.s32 1, %s12
  %s15 = scalar_select 0, %s14, %s12
  $region1: #{tpu_custom_call.1} parent=0
    #allocation4 [shape = 'u8[8192]{0}', space=vmem, size = 0x2000, scoped, tag = 'input window, operand 0']
    #allocation5 [shape = 's32[2]{0}', space=sflag, size = 0x8, scoped, tag = 'scoped memory for tpu_custom_call.1']
    #allocation6 [shape = 's32[2]{0}', space=sflag, size = 0x8, scoped, tag = 'scoped memory for tpu_custom_call.1']
    #allocation7 [shape = 'u8[8192]{0}', space=vmem, size = 0x2000, scoped, tag = 'input window, operand 1']
    #allocation8 [shape = 's32[2]{0}', space=sflag, size = 0x8, scoped, tag = 'scoped memory for tpu_custom_call.1']
    #allocation9 [shape = 'u8[8192]{0}', space=vmem, size = 0x2000, scoped, tag = 'input window, operand 2']
    #allocation10 [shape = 'u8[8192]{0}', space=vmem, size = 0x2000, scoped, tag = 'input window, operand 3, single buffered']
    #allocation11 [shape = 's32[1]{0}', space=sflag, size = 0x4, scoped, tag = 'scoped memory for tpu_custom_call.1']
    #allocation12 [shape = 'u8[8192]{0}', space=vmem, size = 0x2000, scoped, tag = 'input window, operand 4, single buffered']
    #allocation13 [shape = 'u8[8192]{0}', space=vmem, size = 0x2000, scoped, tag = 'output window, operand 0']
    #allocation14 [shape = 'u8[8192]{0}', space=vmem, size = 0x2000, scoped, tag = 'output window, operand 1']
    #allocation15 [shape = 's32[2]{0}', space=sflag, size = 0x8, scoped, tag = 'scoped memory for tpu_custom_call.1']
    %16 = vsyncpa [#allocation5], 0
    %s17 = scalar_lea.sflag [#allocation5], 1
    %18 = vsyncpa %s17, 0
    %19 = vsyncpa [#allocation8], 0
    %s20 = scalar_lea.sflag [#allocation8], 1
    %21 = vsyncpa %s20, 0
    %22 = vsyncpa [#allocation11], 0
    %23 = vsyncpa [#allocation6], 0
    %s24 = scalar_lea.sflag [#allocation6], 1
    %25 = vsyncpa %s24, 0
    %26 = vsyncpa [#allocation15], 0
    %s27 = scalar_lea.sflag [#allocation15], 1
    %28 = vsyncpa %s27, 0
    loop: start=0, step=1, limit=4
    $region2: #{tpu_custom_call.1} parent=1 // loop_pre_header
      _
    $region3: #{tpu_custom_call.1} parent=1 // loop_header
      %s30 = sphi 0, %s34
      %p31 = scmp.ge.s32.totalorder %s30, 4
      %s37 = sphi 0, %s49
      %s38 = sphi 0, %s45
      %s39 = sphi 0, %s37
      %s40 = sphi 0, %s38
      %s41 = sphi 0, %s39
      %s42 = sphi 0, %s40
      %s54 = sphi 0, %s56
      %s57 = sphi 0, %s54
      %s58 = sphi 0, %s57
      %s74 = sphi 0, %s58
      %s80 = sphi 0, %s82
      %s83 = sphi 0, %s80
      %s84 = sphi 0, %s83
      %s100 = sphi 0, %s84
      %s106 = sphi 0, %s108
      %s109 = sphi 0, %s106
      %s110 = sphi 0, %s109
      %s126 = sphi 0, %s110
      %s130 = sphi 0, %s130
      %s132 = sphi 0, %s130
      %s133 = sphi 0, %s132
      %s147 = sphi 0, %s133
      %s151 = sphi 0, %s151
      %s153 = sphi 0, %s151
      %s154 = sphi 0, %s153
      %s168 = sphi 0, %s154
      %s172 = sphi 0, %s172
      %s174 = sphi 0, %s172
      %s175 = sphi 0, %s174
      %s189 = sphi 0, %s175
      %s193 = sphi 0, %s193
      %s195 = sphi 0, %s193
      %s196 = sphi 0, %s195
      %s210 = sphi 0, %s196
      %s214 = sphi 0, %s214
      %s216 = sphi 0, %s214
      %s217 = sphi 0, %s216
      %s231 = sphi 0, %s217
      %s235 = sphi 0, %s235
      %s237 = sphi 0, %s235
      %s238 = sphi 0, %s237
      %s252 = sphi 0, %s238
      %s260 = sphi 0, %s262
      %s263 = sphi 0, %s260
      %s264 = sphi 0, %s263
      %s280 = sphi 0, %s264
      %s288 = sphi 0, %s290
      %s291 = sphi 0, %s288
      %s292 = sphi 0, %s291
      %s308 = sphi 0, %s292
    $region4: #{tpu_custom_call.1} parent=1 // loop_header_branch
      %33 = sbr.rel (%p31) target = $region8
    $region5: #{tpu_custom_call.1} parent=1 // loop_body
      %s35 = ssub.s32 %s30, 1
      %s36 = ssub.s32 %s30, 2
      %s43 = sadd.s32 1, %s38
      %p44 = scmp.ge.s32.totalorder %s43, 1
      %s45 = scalar_select %p44, 0, %s43
      %s46 = sadd.s32 1, %s37
      %s47 = scalar_select %p44, %s46, %s37
      %p48 = scmp.ge.s32.totalorder %s47, 2
      %s49 = scalar_select %p48, 0, %s47
      %s50 = ssub.s32 %s37, %s49
      %s51 = ssub.s32 %s38, %s45
      %s52 = sor.u32 %s50, %s51
      %p53 = scmp.eq.s32.totalorder %s52, 0
      %s55 = sadd.s32 %s54, 1
      %s56 = scalar_select %p53, %s54, %s55
      %p59 = pneg %p53
      %p60 = scmp.eq.s32.totalorder %s30, 1
      %p61 = por %p59, %p60
      %p62 = scmp.ne.s32.totalorder %s54, %s57
      %p63 = scmp.eq.s32.totalorder %s30, 0
      %p64 = por %p62, %p63
      %p65 = scmp.ne.s32.totalorder %s54, %s57
      %p66 = scmp.eq.s32.totalorder %s35, 1
      %p67 = por %p65, %p66
      %p68 = scmp.ne.s32.totalorder %s57, %s58
      %p69 = scmp.eq.s32.totalorder %s35, 0
      %p70 = por %p68, %p69
      %p71 = scmp.ne.s32.totalorder %s57, %s58
      %p72 = scmp.eq.s32.totalorder %s36, 1
      %p73 = por %p71, %p72
      %p75 = scmp.ne.s32.totalorder %s58, %s74
      %p76 = scmp.eq.s32.totalorder %s36, 0
      %p77 = por %p75, %p76
      %s78 = ssub.s32 %s37, %s49
      %p79 = scmp.eq.s32.totalorder %s78, 0
      %s81 = sadd.s32 %s80, 1
      %s82 = scalar_select %p79, %s80, %s81
      %p85 = pneg %p79
      %p86 = scmp.eq.s32.totalorder %s30, 1
      %p87 = por %p85, %p86
      %p88 = scmp.ne.s32.totalorder %s80, %s83
      %p89 = scmp.eq.s32.totalorder %s30, 0
      %p90 = por %p88, %p89
      %p91 = scmp.ne.s32.totalorder %s80, %s83
      %p92 = scmp.eq.s32.totalorder %s35, 1
      %p93 = por %p91, %p92
      %p94 = scmp.ne.s32.totalorder %s83, %s84
      %p95 = scmp.eq.s32.totalorder %s35, 0
      %p96 = por %p94, %p95
      %p97 = scmp.ne.s32.totalorder %s83, %s84
      %p98 = scmp.eq.s32.totalorder %s36, 1
      %p99 = por %p97, %p98
      %p101 = scmp.ne.s32.totalorder %s84, %s100
      %p102 = scmp.eq.s32.totalorder %s36, 0
      %p103 = por %p101, %p102
      %s104 = ssub.s32 %s37, %s49
      %p105 = scmp.eq.s32.totalorder %s104, 0
      %s107 = sadd.s32 %s106, 1
      %s108 = scalar_select %p105, %s106, %s107
      %p111 = pneg %p105
      %p112 = scmp.eq.s32.totalorder %s30, 1
      %p113 = por %p111, %p112
      %p114 = scmp.ne.s32.totalorder %s106, %s109
      %p115 = scmp.eq.s32.totalorder %s30, 0
      %p116 = por %p114, %p115
      %p117 = scmp.ne.s32.totalorder %s106, %s109
      %p118 = scmp.eq.s32.totalorder %s35, 1
      %p119 = por %p117, %p118
      %p120 = scmp.ne.s32.totalorder %s109, %s110
      %p121 = scmp.eq.s32.totalorder %s35, 0
      %p122 = por %p120, %p121
      %p123 = scmp.ne.s32.totalorder %s109, %s110
      %p124 = scmp.eq.s32.totalorder %s36, 1
      %p125 = por %p123, %p124
      %p127 = scmp.ne.s32.totalorder %s110, %s126
      %p128 = scmp.eq.s32.totalorder %s36, 0
      %p129 = por %p127, %p128
      %s131 = sadd.s32 %s130, 1
      %p134 = scmp.eq.s32.totalorder %s30, 1
      %p135 = scmp.ne.s32.totalorder %s130, %s132
      %p136 = scmp.eq.s32.totalorder %s30, 0
      %p137 = por %p135, %p136
      %p138 = scmp.ne.s32.totalorder %s130, %s132
      %p139 = scmp.eq.s32.totalorder %s35, 1
      %p140 = por %p138, %p139
      %p141 = scmp.ne.s32.totalorder %s132, %s133
      %p142 = scmp.eq.s32.totalorder %s35, 0
      %p143 = por %p141, %p142
      %p144 = scmp.ne.s32.totalorder %s132, %s133
      %p145 = scmp.eq.s32.totalorder %s36, 1
      %p146 = por %p144, %p145
      %p148 = scmp.ne.s32.totalorder %s133, %s147
      %p149 = scmp.eq.s32.totalorder %s36, 0
      %p150 = por %p148, %p149
      %s152 = sadd.s32 %s151, 1
      %p155 = scmp.eq.s32.totalorder %s30, 1
      %p156 = scmp.ne.s32.totalorder %s151, %s153
      %p157 = scmp.eq.s32.totalorder %s30, 0
      %p158 = por %p156, %p157
      %p159 = scmp.ne.s32.totalorder %s151, %s153
      %p160 = scmp.eq.s32.totalorder %s35, 1
      %p161 = por %p159, %p160
      %p162 = scmp.ne.s32.totalorder %s153, %s154
      %p163 = scmp.eq.s32.totalorder %s35, 0
      %p164 = por %p162, %p163
      %p165 = scmp.ne.s32.totalorder %s153, %s154
      %p166 = scmp.eq.s32.totalorder %s36, 1
      %p167 = por %p165, %p166
      %p169 = scmp.ne.s32.totalorder %s154, %s168
      %p170 = scmp.eq.s32.totalorder %s36, 0
      %p171 = por %p169, %p170
      %s173 = sadd.s32 %s172, 1
      %p176 = scmp.eq.s32.totalorder %s30, 1
      %p177 = scmp.ne.s32.totalorder %s172, %s174
      %p178 = scmp.eq.s32.totalorder %s30, 0
      %p179 = por %p177, %p178
      %p180 = scmp.ne.s32.totalorder %s172, %s174
      %p181 = scmp.eq.s32.totalorder %s35, 1
      %p182 = por %p180, %p181
      %p183 = scmp.ne.s32.totalorder %s174, %s175
      %p184 = scmp.eq.s32.totalorder %s35, 0
      %p185 = por %p183, %p184
      %p186 = scmp.ne.s32.totalorder %s174, %s175
      %p187 = scmp.eq.s32.totalorder %s36, 1
      %p188 = por %p186, %p187
      %p190 = scmp.ne.s32.totalorder %s175, %s189
      %p191 = scmp.eq.s32.totalorder %s36, 0
      %p192 = por %p190, %p191
      %s194 = sadd.s32 %s193, 1
      %p197 = scmp.eq.s32.totalorder %s30, 1
      %p198 = scmp.ne.s32.totalorder %s193, %s195
      %p199 = scmp.eq.s32.totalorder %s30, 0
      %p200 = por %p198, %p199
      %p201 = scmp.ne.s32.totalorder %s193, %s195
      %p202 = scmp.eq.s32.totalorder %s35, 1
      %p203 = por %p201, %p202
      %p204 = scmp.ne.s32.totalorder %s195, %s196
      %p205 = scmp.eq.s32.totalorder %s35, 0
      %p206 = por %p204, %p205
      %p207 = scmp.ne.s32.totalorder %s195, %s196
      %p208 = scmp.eq.s32.totalorder %s36, 1
      %p209 = por %p207, %p208
      %p211 = scmp.ne.s32.totalorder %s196, %s210
      %p212 = scmp.eq.s32.totalorder %s36, 0
      %p213 = por %p211, %p212
      %s215 = sadd.s32 %s214, 1
      %p218 = scmp.eq.s32.totalorder %s30, 1
      %p219 = scmp.ne.s32.totalorder %s214, %s216
      %p220 = scmp.eq.s32.totalorder %s30, 0
      %p221 = por %p219, %p220
      %p222 = scmp.ne.s32.totalorder %s214, %s216
      %p223 = scmp.eq.s32.totalorder %s35, 1
      %p224 = por %p222, %p223
      %p225 = scmp.ne.s32.totalorder %s216, %s217
      %p226 = scmp.eq.s32.totalorder %s35, 0
      %p227 = por %p225, %p226
      %p228 = scmp.ne.s32.totalorder %s216, %s217
      %p229 = scmp.eq.s32.totalorder %s36, 1
      %p230 = por %p228, %p229
      %p232 = scmp.ne.s32.totalorder %s217, %s231
      %p233 = scmp.eq.s32.totalorder %s36, 0
      %p234 = por %p232, %p233
      %s236 = sadd.s32 %s235, 1
      %p239 = scmp.eq.s32.totalorder %s30, 1
      %p240 = scmp.ne.s32.totalorder %s235, %s237
      %p241 = scmp.eq.s32.totalorder %s30, 0
      %p242 = por %p240, %p241
      %p243 = scmp.ne.s32.totalorder %s235, %s237
      %p244 = scmp.eq.s32.totalorder %s35, 1
      %p245 = por %p243, %p244
      %p246 = scmp.ne.s32.totalorder %s237, %s238
      %p247 = scmp.eq.s32.totalorder %s35, 0
      %p248 = por %p246, %p247
      %p249 = scmp.ne.s32.totalorder %s237, %s238
      %p250 = scmp.eq.s32.totalorder %s36, 1
      %p251 = por %p249, %p250
      %p253 = scmp.ne.s32.totalorder %s238, %s252
      %p254 = scmp.eq.s32.totalorder %s36, 0
      %p255 = por %p253, %p254
      %s256 = ssub.s32 %s37, %s49
      %s257 = ssub.s32 %s38, %s45
      %s258 = sor.u32 %s256, %s257
      %p259 = scmp.eq.s32.totalorder %s258, 0
      %s261 = sadd.s32 %s260, 1
      %s262 = scalar_select %p259, %s260, %s261
      %p265 = pneg %p259
      %p266 = scmp.eq.s32.totalorder %s30, 1
      %p267 = por %p265, %p266
      %p268 = scmp.ne.s32.totalorder %s260, %s263
      %p269 = scmp.eq.s32.totalorder %s30, 0
      %p270 = por %p268, %p269
      %p271 = scmp.ne.s32.totalorder %s260, %s263
      %p272 = scmp.eq.s32.totalorder %s35, 1
      %p273 = por %p271, %p272
      %p274 = scmp.ne.s32.totalorder %s263, %s264
      %p275 = scmp.eq.s32.totalorder %s35, 0
      %p276 = por %p274, %p275
      %p277 = scmp.ne.s32.totalorder %s263, %s264
      %p278 = scmp.eq.s32.totalorder %s36, 1
      %p279 = por %p277, %p278
      %p281 = scmp.ne.s32.totalorder %s264, %s280
      %p282 = scmp.eq.s32.totalorder %s36, 0
      %p283 = por %p281, %p282
      %s284 = ssub.s32 %s37, %s49
      %s285 = ssub.s32 %s38, %s45
      %s286 = sor.u32 %s284, %s285
      %p287 = scmp.eq.s32.totalorder %s286, 0
      %s289 = sadd.s32 %s288, 1
      %s290 = scalar_select %p287, %s288, %s289
      %p293 = pneg %p287
      %p294 = scmp.eq.s32.totalorder %s30, 1
      %p295 = por %p293, %p294
      %p296 = scmp.ne.s32.totalorder %s288, %s291
      %p297 = scmp.eq.s32.totalorder %s30, 0
      %p298 = por %p296, %p297
      %p299 = scmp.ne.s32.totalorder %s288, %s291
      %p300 = scmp.eq.s32.totalorder %s35, 1
      %p301 = por %p299, %p300
      %p302 = scmp.ne.s32.totalorder %s291, %s292
      %p303 = scmp.eq.s32.totalorder %s35, 0
      %p304 = por %p302, %p303
      %p305 = scmp.ne.s32.totalorder %s291, %s292
      %p306 = scmp.eq.s32.totalorder %s36, 1
      %p307 = por %p305, %p306
      %p309 = scmp.ne.s32.totalorder %s292, %s308
      %p310 = scmp.eq.s32.totalorder %s36, 0
      %p311 = por %p309, %p310
      %p312 = scmp.le.s32.totalorder 1, %s30
      %p313 = scmp.lt.s32.totalorder %s30, 3
      %p314 = pnand %p312, %p313
      %p315 = pneg %p314
      // Predicated region
      $region9: #{tpu_custom_call.1} parent=5 // pred_check
        _
      $region10: #{tpu_custom_call.1} parent=5 // pred_check_branch
        %317 = sbr.rel (%p314) target = $region12
      $region11: #{tpu_custom_call.1} parent=5 // pred_region
        %s318 = ssub.s32 %s30, 1
        // Predicated region
        $region13: #{tpu_custom_call.1} parent=11 // pred_check
          %p319 = pneg %p143
        $region14: #{tpu_custom_call.1} parent=11 // pred_check_branch
          %321 = sbr.rel (%p319) target = $region16
        $region15: #{tpu_custom_call.1} parent=11 // pred_region
          %s323 = ssub.s32 256, 256
          %324 = vsyncadd [#allocation11], %s323
          %s325 = sshll.u32 [#allocation10], 4
          %s326 = int_to_ptr.vmem [resolvable:$true] %s325
          %331 = dma.hbm_to_vmem [thread:$0]  %s3, 256, %s326, [#allocation11], 64, 64, 4
        $region16: #{tpu_custom_call.1} parent=11 // pred_fallthru
          _
        // Predicated region
        $region17: #{tpu_custom_call.1} parent=11 // pred_check
          %p332 = pneg %p164
        $region18: #{tpu_custom_call.1} parent=11 // pred_check_branch
          %334 = sbr.rel (%p332) target = $region20
        $region19: #{tpu_custom_call.1} parent=11 // pred_region
          %s336 = ssub.s32 256, 256
          %337 = vsyncadd [#allocation11], %s336
          %s338 = sshll.u32 [#allocation12], 4
          %s339 = int_to_ptr.vmem [resolvable:$true] %s338
          %344 = dma.hbm_to_vmem [thread:$0]  %s4, 256, %s339, [#allocation11], 64, 64, 4
        $region20: #{tpu_custom_call.1} parent=11 // pred_fallthru
          _
        // Predicated region
        $region21: #{tpu_custom_call.1} parent=11 // pred_check
          %p345 = pneg %p185
        $region22: #{tpu_custom_call.1} parent=11 // pred_check_branch
          %347 = sbr.rel (%p345) target = $region24
        $region23: #{tpu_custom_call.1} parent=11 // pred_region
          _
        $region24: #{tpu_custom_call.1} parent=11 // pred_fallthru
          _
        // Predicated region
        $region25: #{tpu_custom_call.1} parent=11 // pred_check
          %p348 = pneg %p206
        $region26: #{tpu_custom_call.1} parent=11 // pred_check_branch
          %350 = sbr.rel (%p348) target = $region28
        $region27: #{tpu_custom_call.1} parent=11 // pred_region
          _
        $region28: #{tpu_custom_call.1} parent=11 // pred_fallthru
          _
        // Predicated region
        $region29: #{tpu_custom_call.1} parent=11 // pred_check
          %p351 = pneg %p227
        $region30: #{tpu_custom_call.1} parent=11 // pred_check_branch
          %353 = sbr.rel (%p351) target = $region32
        $region31: #{tpu_custom_call.1} parent=11 // pred_region
          _
        $region32: #{tpu_custom_call.1} parent=11 // pred_fallthru
          _
        // Predicated region
        $region33: #{tpu_custom_call.1} parent=11 // pred_check
          %p354 = pneg %p248
        $region34: #{tpu_custom_call.1} parent=11 // pred_check_branch
          %356 = sbr.rel (%p354) target = $region36
        $region35: #{tpu_custom_call.1} parent=11 // pred_region
          _
        $region36: #{tpu_custom_call.1} parent=11 // pred_fallthru
          _
      $region12: #{tpu_custom_call.1} parent=5 // pred_fallthru
        _
      %p357 = scmp.lt.s32.totalorder %s30, 2
      // Predicated region
      $region37: #{tpu_custom_call.1} parent=5 // pred_check
        %p358 = pneg %p357
      $region38: #{tpu_custom_call.1} parent=5 // pred_check_branch
        %360 = sbr.rel (%p358) target = $region40
      $region39: #{tpu_custom_call.1} parent=5 // pred_region
        // Predicated region
        $region41: #{tpu_custom_call.1} parent=39 // pred_check
          %p361 = pneg %p64
        $region42: #{tpu_custom_call.1} parent=39 // pred_check_branch
          %363 = sbr.rel (%p361) target = $region44
        $region43: #{tpu_custom_call.1} parent=39 // pred_region
          %s364 = sand.u32 %s54, 1
          %s365 = scalar_lea.sflag [#allocation5], %s364
          %s366 = sand.u32 %s54, 1
          %s367 = smul.addr %s366, 8
          %s368 = scalar_lea.vmem [#allocation4], %s367
          %s370 = ssub.s32 128, 128
          %371 = vsyncadd %s365, %s370
          %s372 = sadd.s32 %s38, %s37
          %s373 = smul.addr %s372, 128
          %s374 = scalar_lea.hbm %s0, %s373
          %s376 = sshll.u32 %s368, 4
          %s377 = int_to_ptr.vmem [resolvable:$true] %s376
          %379 = dma.hbm_to_vmem [thread:$0]  %s374, 128, %s377, %s365
        $region44: #{tpu_custom_call.1} parent=39 // pred_fallthru
          _
        // Predicated region
        $region45: #{tpu_custom_call.1} parent=39 // pred_check
          %p380 = pneg %p90
        $region46: #{tpu_custom_call.1} parent=39 // pred_check_branch
          %382 = sbr.rel (%p380) target = $region48
        $region47: #{tpu_custom_call.1} parent=39 // pred_region
          %s383 = sand.u32 %s30, 1
          %s384 = scalar_lea.sflag [#allocation8], %s383
          %s385 = sand.u32 %s80, 1
          %s386 = smul.addr %s385, 8
          %s387 = scalar_lea.vmem [#allocation7], %s386
          %s389 = ssub.s32 128, 128
          %390 = vsyncadd %s384, %s389
          %s391 = smul.addr %s37, 128
          %s392 = scalar_lea.hbm %s1, %s391
          %s394 = sshll.u32 %s387, 4
          %s395 = int_to_ptr.vmem [resolvable:$true] %s394
          %397 = dma.hbm_to_vmem [thread:$0]  %s392, 128, %s395, %s384
        $region48: #{tpu_custom_call.1} parent=39 // pred_fallthru
          _
        // Predicated region
        $region49: #{tpu_custom_call.1} parent=39 // pred_check
          %p398 = pneg %p116
        $region50: #{tpu_custom_call.1} parent=39 // pred_check_branch
          %400 = sbr.rel (%p398) target = $region52
        $region51: #{tpu_custom_call.1} parent=39 // pred_region
          %s401 = sand.u32 %s30, 1
          %s402 = scalar_lea.sflag [#allocation8], %s401
          %s403 = sand.u32 %s106, 1
          %s404 = smul.addr %s403, 8
          %s405 = scalar_lea.vmem [#allocation9], %s404
          %s407 = ssub.s32 128, 128
          %408 = vsyncadd %s402, %s407
          %s409 = smul.addr %s37, 128
          %s410 = scalar_lea.hbm %s2, %s409
          %s412 = sshll.u32 %s405, 4
          %s413 = int_to_ptr.vmem [resolvable:$true] %s412
          %415 = dma.hbm_to_vmem [thread:$0]  %s410, 128, %s413, %s402
        $region52: #{tpu_custom_call.1} parent=39 // pred_fallthru
          _
      $region40: #{tpu_custom_call.1} parent=5 // pred_fallthru
        _
      %p416 = scmp.le.s32.totalorder 1, %s30
      %p417 = scmp.lt.s32.totalorder %s30, 3
      %p418 = pnand %p416, %p417
      %p419 = pneg %p418
      // Predicated region
      $region53: #{tpu_custom_call.1} parent=5 // pred_check
        _
      $region54: #{tpu_custom_call.1} parent=5 // pred_check_branch
        %421 = sbr.rel (%p418) target = $region56
      $region55: #{tpu_custom_call.1} parent=5 // pred_region
        %s422 = ssub.s32 %s30, 1
        %s423 = sand.u32 %s57, 1
        %s424 = scalar_lea.sflag [#allocation5], %s423
        %s425 = sand.u32 %s57, 1
        %s426 = smul.addr %s425, 8
        %s427 = scalar_lea.vmem [#allocation4], %s426
        // Predicated region
        $region57: #{tpu_custom_call.1} parent=55 // pred_check
          %p428 = pneg %p70
        $region58: #{tpu_custom_call.1} parent=55 // pred_check_branch
          %430 = sbr.rel (%p428) target = $region60
        $region59: #{tpu_custom_call.1} parent=55 // pred_region
          %431 = dma.done %s424, 128
        $region60: #{tpu_custom_call.1} parent=55 // pred_fallthru
          _
        %s432 = sand.u32 %s35, 1
        %s433 = scalar_lea.sflag [#allocation8], %s432
        %s434 = sand.u32 %s83, 1
        %s435 = smul.addr %s434, 8
        %s436 = scalar_lea.vmem [#allocation7], %s435
        // Predicated region
        $region61: #{tpu_custom_call.1} parent=55 // pred_check
          %p437 = pneg %p96
        $region62: #{tpu_custom_call.1} parent=55 // pred_check_branch
          %439 = sbr.rel (%p437) target = $region64
        $region63: #{tpu_custom_call.1} parent=55 // pred_region
          %440 = dma.done %s433, 128
        $region64: #{tpu_custom_call.1} parent=55 // pred_fallthru
          _
        %s441 = sand.u32 %s35, 1
        %s442 = scalar_lea.sflag [#allocation8], %s441
        %s443 = sand.u32 %s109, 1
        %s444 = smul.addr %s443, 8
        %s445 = scalar_lea.vmem [#allocation9], %s444
        // Predicated region
        $region65: #{tpu_custom_call.1} parent=55 // pred_check
          %p446 = pneg %p122
        $region66: #{tpu_custom_call.1} parent=55 // pred_check_branch
          %448 = sbr.rel (%p446) target = $region68
        $region67: #{tpu_custom_call.1} parent=55 // pred_region
          %449 = dma.done %s442, 128
        $region68: #{tpu_custom_call.1} parent=55 // pred_fallthru
          _
        // Predicated region
        $region69: #{tpu_custom_call.1} parent=55 // pred_check
          %p450 = pneg %p143
        $region70: #{tpu_custom_call.1} parent=55 // pred_check_branch
          %452 = sbr.rel (%p450) target = $region72
        $region71: #{tpu_custom_call.1} parent=55 // pred_region
          %453 = dma.done [#allocation11], 256
        $region72: #{tpu_custom_call.1} parent=55 // pred_fallthru
          _
        // Predicated region
        $region73: #{tpu_custom_call.1} parent=55 // pred_check
          %p454 = pneg %p164
        $region74: #{tpu_custom_call.1} parent=55 // pred_check_branch
          %456 = sbr.rel (%p454) target = $region76
        $region75: #{tpu_custom_call.1} parent=55 // pred_region
          %457 = dma.done [#allocation11], 256
        $region76: #{tpu_custom_call.1} parent=55 // pred_fallthru
          _
        %s458 = sand.u32 %s57, 1
        %s459 = scalar_lea.sflag [#allocation5], %s458
        %s460 = sand.u32 %s57, 1
        %s461 = smul.addr %s460, 8
        %s462 = scalar_lea.vmem [#allocation4], %s461
        %p463 = pneg %p70
        %p464 = pneg %p67
        %s465 = sand.u32 %s35, 1
        %s466 = scalar_lea.sflag [#allocation8], %s465
        %s467 = sand.u32 %s83, 1
        %s468 = smul.addr %s467, 8
        %s469 = scalar_lea.vmem [#allocation7], %s468
        %p470 = pneg %p96
        %p471 = pneg %p93
        %s472 = sand.u32 %s35, 1
        %s473 = scalar_lea.sflag [#allocation8], %s472
        %s474 = sand.u32 %s109, 1
        %s475 = smul.addr %s474, 8
        %s476 = scalar_lea.vmem [#allocation9], %s475
        %p477 = pneg %p122
        %p478 = pneg %p119
        %p479 = pneg %p143
        %p480 = pneg %p140
        %p481 = pneg %p164
        %p482 = pneg %p161
        %p483 = pneg %p185
        %p484 = pneg %p182
        %p485 = pneg %p206
        %p486 = pneg %p203
        %p487 = pneg %p227
        %p488 = pneg %p224
        %p489 = pneg %p248
        %p490 = pneg %p245
        %p491 = pneg %p276
        %p492 = pneg %p273
        %s493 = sand.u32 %s263, 1
        %s494 = scalar_lea.sflag [#allocation6], %s493
        %s495 = sand.u32 %s263, 1
        %s496 = smul.addr %s495, 8
        %s497 = scalar_lea.vmem [#allocation13], %s496
        %p498 = pneg %p304
        %p499 = pneg %p301
        %s500 = sand.u32 %s291, 1
        %s501 = scalar_lea.sflag [#allocation15], %s500
        %s502 = sand.u32 %s291, 1
        %s503 = smul.addr %s502, 8
        %s504 = scalar_lea.vmem [#allocation14], %s503
        %p506 = scmp.eq.s32.totalorder %s40, 0
        // Predicated region
        $region77: #{tpu_custom_call.1} parent=55 // pred_check
          %p507 = pneg %p506
        $region78: #{tpu_custom_call.1} parent=55 // pred_check_branch
          %509 = sbr.rel (%p507) target = $region80
        $region79: #{tpu_custom_call.1} parent=55 // pred_region
          %v510 = vld [vmem:[%s436] sm:$0xff]
          %v511 = vpack.c.bf16 %v510, %v510
          %v512 = vld [vmem:[%s445] sm:$0xff]
          %v513 = vpack.c.bf16 %v512, %v512
          %v514 = vld [vmem:[#allocation12] sm:$0xf]
          %v515 = vld [vmem:[#allocation12 + $0x4] sm:$0xf]
          %v516 = vld [vmem:[#allocation12 + $0x8] sm:$0xf]
          %v517 = vld [vmem:[#allocation12 + $0xc] sm:$0xf]
          %v518 = vld [vmem:[%s7] sm:$0x1]
          %v520 = vlaneseq
          %v521 = vshrl.u32 %v520, 7
          %v522 = vsub.s32 0, %v521
          %v523 = vrot.slane %v518, %v522
          %v529 = vunpack.c.l.b16 %v514
          %v530 = vunpack.c.l.b16 %v515
          %v531 = vunpack.c.l.b16 %v516
          %v532 = vunpack.c.l.b16 %v517
          %v533 = vpack.c.b16 %v530, %v529
          %v534 = vpack.c.b16 %v532, %v531
          %vm537 = vcmask 261120
          %v539 = vsel %vm537, %v511, 0
          %541 = vmatprep.subr.bf16.mxu0 0
          %542 = vmatpush1.bf16.msra.mxu0 %v533
          %543 = vmatprep.subr.bf16.mxu0 0
          %544 = vmatpush1.bf16.msra.mxu0 %v534
          %545 = vmatprep.subr.bf16.mxu0 0
          %546 = vmatpush1.bf16.msra.mxu0 0
          %547 = vmatprep.subr.bf16.mxu0 0
          %548 = vmatpush1.bf16.msra.mxu0 0
          %549 = vmatprep.subr.bf16.mxu0 0
          %550 = vmatpush1.bf16.msra.mxu0 0
          %551 = vmatprep.subr.bf16.mxu0 0
          %552 = vmatpush1.bf16.msra.mxu0 0
          %553 = vmatprep.subr.bf16.mxu0 0
          %554 = vmatpush1.bf16.msra.mxu0 0
          %555 = vmatprep.subr.bf16.mxu0 0
          %556 = vmatpush1.bf16.msra.mxu0 0
          %557 = vmatprep.subr.bf16.mxu0 0
          %558 = vmatpush1.bf16.msra.mxu0 0
          %559 = vmatprep.subr.bf16.mxu0 0
          %560 = vmatpush1.bf16.msra.mxu0 0
          %561 = vmatprep.subr.bf16.mxu0 0
          %562 = vmatpush1.bf16.msra.mxu0 0
          %563 = vmatprep.subr.bf16.mxu0 0
          %564 = vmatpush1.bf16.msra.mxu0 0
          %565 = vmatprep.subr.bf16.mxu0 0
          %566 = vmatpush1.bf16.msra.mxu0 0
          %567 = vmatprep.subr.bf16.mxu0 0
          %568 = vmatpush1.bf16.msra.mxu0 0
          %569 = vmatprep.subr.bf16.mxu0 0
          %570 = vmatpush1.bf16.msra.mxu0 0
          %571 = vmatprep.subr.bf16.mxu0 0
          %572 = vmatpush1.bf16.msra.mxu0 0
          %573 = vmatprep.mubr.bf16.mxu0 0
          %574 = vmatmul.mubr.bf16.gmra.mrb[0].mxu0 %v539
          %v575 = vpop.f32.mrb[0].mxu0
          %v576 = vadd.f32 %v523, %v575
          %v577 = vpop.f32.mrb[0].mxu0
          %v578 = vpop.f32.mrb[0].mxu0
          %v579 = vpop.f32.mrb[0].mxu0
          %580 = vdwg.mxu0
          %v581 = vld [vmem:[%s5] sm:$0xf]
          %v582 = vld [vmem:[%s5 + $0x4] sm:$0xf]
          %v583 = vld [vmem:[%s5 + $0x8] sm:$0xf]
          %v584 = vld [vmem:[%s5 + $0xc] sm:$0xf]
          %v585 = vld [vmem:[%s8] sm:$0x1]
          %v587 = vlaneseq
          %v588 = vshrl.u32 %v587, 7
          %v589 = vsub.s32 0, %v588
          %v590 = vrot.slane %v585, %v589
          %v596 = vunpack.c.l.b16 %v581
          %v597 = vunpack.c.l.b16 %v582
          %v598 = vunpack.c.l.b16 %v583
          %v599 = vunpack.c.l.b16 %v584
          %v600 = vpack.c.b16 %v597, %v596
          %v601 = vpack.c.b16 %v599, %v598
          %v605 = vsel %vm537, %v513, 0
          %607 = vmatprep.subr.bf16.mxu0 0
          %608 = vmatpush1.bf16.msra.mxu0 %v600
          %609 = vmatprep.subr.bf16.mxu0 0
          %610 = vmatpush1.bf16.msra.mxu0 %v601
          %611 = vmatprep.subr.bf16.mxu0 0
          %612 = vmatpush1.bf16.msra.mxu0 0
          %613 = vmatprep.subr.bf16.mxu0 0
          %614 = vmatpush1.bf16.msra.mxu0 0
          %615 = vmatprep.subr.bf16.mxu0 0
          %616 = vmatpush1.bf16.msra.mxu0 0
          %617 = vmatprep.subr.bf16.mxu0 0
          %618 = vmatpush1.bf16.msra.mxu0 0
          %619 = vmatprep.subr.bf16.mxu0 0
          %620 = vmatpush1.bf16.msra.mxu0 0
          %621 = vmatprep.subr.bf16.mxu0 0
          %622 = vmatpush1.bf16.msra.mxu0 0
          %623 = vmatprep.subr.bf16.mxu0 0
          %624 = vmatpush1.bf16.msra.mxu0 0
          %625 = vmatprep.subr.bf16.mxu0 0
          %626 = vmatpush1.bf16.msra.mxu0 0
          %627 = vmatprep.subr.bf16.mxu0 0
          %628 = vmatpush1.bf16.msra.mxu0 0
          %629 = vmatprep.subr.bf16.mxu0 0
          %630 = vmatpush1.bf16.msra.mxu0 0
          %631 = vmatprep.subr.bf16.mxu0 0
          %632 = vmatpush1.bf16.msra.mxu0 0
          %633 = vmatprep.subr.bf16.mxu0 0
          %634 = vmatpush1.bf16.msra.mxu0 0
          %635 = vmatprep.subr.bf16.mxu0 0
          %636 = vmatpush1.bf16.msra.mxu0 0
          %637 = vmatprep.subr.bf16.mxu0 0
          %638 = vmatpush1.bf16.msra.mxu0 0
          %639 = vmatprep.mubr.bf16.mxu0 0
          %640 = vmatmul.mubr.bf16.gmra.mrb[0].mxu0 %v605
          %v641 = vpop.f32.mrb[0].mxu0
          %v642 = vadd.f32 %v590, %v641
          %v643 = vpop.f32.mrb[0].mxu0
          %v644 = vpop.f32.mrb[0].mxu0
          %v645 = vpop.f32.mrb[0].mxu0
          %646 = vdwg.mxu0
          %v647 = vpack.c.bf16 %v576, %v576
          %648 = vst [vmem:[#allocation2] sm:$0xf] %v647
          %v649 = vpack.c.bf16 %v642, %v642
          %650 = vst [vmem:[#allocation3] sm:$0xf] %v649
        $region80: #{tpu_custom_call.1} parent=55 // pred_fallthru
          _
        %v651 = vld [vmem:[%s427] sm:$0xff]
        %v652 = vpack.c.bf16 %v651, %v651
        %v653 = vld [vmem:[#allocation10] sm:$0xf]
        %v654 = vld [vmem:[#allocation10 + $0x4] sm:$0xf]
        %v655 = vld [vmem:[#allocation10 + $0x8] sm:$0xf]
        %v656 = vld [vmem:[#allocation10 + $0xc] sm:$0xf]
        %v657 = vld [vmem:[%s6] sm:$0x1]
        %v659 = vlaneseq
        %v660 = vshrl.u32 %v659, 7
        %v661 = vsub.s32 0, %v660
        %v662 = vrot.slane %v657, %v661
        %v668 = vunpack.c.l.b16 %v653
        %v669 = vunpack.c.l.b16 %v654
        %v670 = vunpack.c.l.b16 %v655
        %v671 = vunpack.c.l.b16 %v656
        %v672 = vpack.c.b16 %v669, %v668
        %v673 = vpack.c.b16 %v671, %v670
        %vm676 = vcmask 261120
        %v678 = vsel %vm676, %v652, 0
        %680 = vmatprep.subr.bf16.mxu0 0
        %681 = vmatpush1.bf16.msra.mxu0 %v672
        %682 = vmatprep.subr.bf16.mxu0 0
        %683 = vmatpush1.bf16.msra.mxu0 %v673
        %684 = vmatprep.subr.bf16.mxu0 0
        %685 = vmatpush1.bf16.msra.mxu0 0
        %686 = vmatprep.subr.bf16.mxu0 0
        %687 = vmatpush1.bf16.msra.mxu0 0
        %688 = vmatprep.subr.bf16.mxu0 0
        %689 = vmatpush1.bf16.msra.mxu0 0
        %690 = vmatprep.subr.bf16.mxu0 0
        %691 = vmatpush1.bf16.msra.mxu0 0
        %692 = vmatprep.subr.bf16.mxu0 0
        %693 = vmatpush1.bf16.msra.mxu0 0
        %694 = vmatprep.subr.bf16.mxu0 0
        %695 = vmatpush1.bf16.msra.mxu0 0
        %696 = vmatprep.subr.bf16.mxu0 0
        %697 = vmatpush1.bf16.msra.mxu0 0
        %698 = vmatprep.subr.bf16.mxu0 0
        %699 = vmatpush1.bf16.msra.mxu0 0
        %700 = vmatprep.subr.bf16.mxu0 0
        %701 = vmatpush1.bf16.msra.mxu0 0
        %702 = vmatprep.subr.bf16.mxu0 0
        %703 = vmatpush1.bf16.msra.mxu0 0
        %704 = vmatprep.subr.bf16.mxu0 0
        %705 = vmatpush1.bf16.msra.mxu0 0
        %706 = vmatprep.subr.bf16.mxu0 0
        %707 = vmatpush1.bf16.msra.mxu0 0
        %708 = vmatprep.subr.bf16.mxu0 0
        %709 = vmatpush1.bf16.msra.mxu0 0
        %710 = vmatprep.subr.bf16.mxu0 0
        %711 = vmatpush1.bf16.msra.mxu0 0
        %712 = vmatprep.mubr.bf16.mxu0 0
        %713 = vmatmul.mubr.bf16.gmra.mrb[0].mxu0 %v678
        %v714 = vpop.f32.mrb[0].mxu0
        %v715 = vadd.f32 %v662, %v714
        %v716 = vpop.f32.mrb[0].mxu0
        %v717 = vpop.f32.mrb[0].mxu0
        %v718 = vpop.f32.mrb[0].mxu0
        %719 = vdwg.mxu0
        %v720 = vmul.f32 %v715, 0.25
        %v721 = vpack.c.bf16 %v720, %v720
        %v722 = vld [vmem:[#allocation2] sm:$0xf]
        %723 = vmatprep.subr.bf16.mxu0 0
        %724 = vmatpush1.bf16.xpose.msra.mxu0 %v722
        %725 = vmatprep.subr.bf16.mxu0 0
        %726 = vmatpush1.bf16.xpose.msra.mxu0 0
        %727 = vmatprep.subr.bf16.mxu0 0
        %728 = vmatpush1.bf16.xpose.msra.mxu0 0
        %729 = vmatprep.subr.bf16.mxu0 0
        %730 = vmatpush1.bf16.xpose.msra.mxu0 0
        %731 = vmatprep.subr.bf16.mxu0 0
        %732 = vmatpush1.bf16.xpose.msra.mxu0 0
        %733 = vmatprep.subr.bf16.mxu0 0
        %734 = vmatpush1.bf16.xpose.msra.mxu0 0
        %735 = vmatprep.subr.bf16.mxu0 0
        %736 = vmatpush1.bf16.xpose.msra.mxu0 0
        %737 = vmatprep.subr.bf16.mxu0 0
        %738 = vmatpush1.bf16.xpose.msra.mxu0 0
        %739 = vmatprep.subr.bf16.mxu0 0
        %740 = vmatpush1.bf16.xpose.msra.mxu0 0
        %741 = vmatprep.subr.bf16.mxu0 0
        %742 = vmatpush1.bf16.xpose.msra.mxu0 0
        %743 = vmatprep.subr.bf16.mxu0 0
        %744 = vmatpush1.bf16.xpose.msra.mxu0 0
        %745 = vmatprep.subr.bf16.mxu0 0
        %746 = vmatpush1.bf16.xpose.msra.mxu0 0
        %747 = vmatprep.subr.bf16.mxu0 0
        %748 = vmatpush1.bf16.xpose.msra.mxu0 0
        %749 = vmatprep.subr.bf16.mxu0 0
        %750 = vmatpush1.bf16.xpose.msra.mxu0 0
        %751 = vmatprep.subr.bf16.mxu0 0
        %752 = vmatpush1.bf16.xpose.msra.mxu0 0
        %753 = vmatprep.subr.bf16.mxu0 0
        %754 = vmatpush1.bf16.xpose.msra.mxu0 0
        %755 = vmatprep.mubr.bf16.mxu0 0
        %756 = vmatmul.mubr.bf16.gmra.mrb[0].mxu0 %v721
        %v757 = vpop.f32.mrb[0].mxu0
        %v758 = vadd.f32 0.0, %v757
        %v759 = vpop.f32.mrb[0].mxu0
        %v760 = vpop.f32.mrb[0].mxu0
        %v761 = vpop.f32.mrb[0].mxu0
        %762 = vdwg.mxu0
        %vm763 = vcmask 64512
        %v764 = vsel %vm763, %v758, -inf
        %765 = vmax.xlane.f32.xlu0 %v764
        %v766 = vpop.xlane.xlu0 %765
        %v767 = vsub.f32 %v758, %v766
        %v768 = vmul.f32 %v767, 1.442695
        %v769 = vpow.pop %v768
        %v770 = vsel %vm763, %v769, 0.0
        %771 = vadd.xlane.f32.xlu0 %v770
        %v772 = vpop.xlane.xlu0 %771
        %v773 = vrcp.pop %v772
        %v774 = vmul.f32 %v769, %v773
        %v775 = vpack.c.bf16 %v774, %v774
        %v776 = vld [vmem:[#allocation3] sm:$0xf]
        %v778 = vsel %vm763, %v775, 0
        %vm780 = vcmask 1043456
        %v782 = vsel %vm780, %v776, 0
        %784 = vmatprep.subr.bf16.mxu0 0
        %785 = vmatpush1.bf16.msra.mxu0 %v782
        %786 = vmatprep.subr.bf16.mxu0 0
        %787 = vmatpush1.bf16.msra.mxu0 0
        %788 = vmatprep.subr.bf16.mxu0 0
        %789 = vmatpush1.bf16.msra.mxu0 0
        %790 = vmatprep.subr.bf16.mxu0 0
        %791 = vmatpush1.bf16.msra.mxu0 0
        %792 = vmatprep.subr.bf16.mxu0 0
        %793 = vmatpush1.bf16.msra.mxu0 0
        %794 = vmatprep.subr.bf16.mxu0 0
        %795 = vmatpush1.bf16.msra.mxu0 0
        %796 = vmatprep.subr.bf16.mxu0 0
        %797 = vmatpush1.bf16.msra.mxu0 0
        %798 = vmatprep.subr.bf16.mxu0 0
        %799 = vmatpush1.bf16.msra.mxu0 0
        %800 = vmatprep.subr.bf16.mxu0 0
        %801 = vmatpush1.bf16.msra.mxu0 0
        %802 = vmatprep.subr.bf16.mxu0 0
        %803 = vmatpush1.bf16.msra.mxu0 0
        %804 = vmatprep.subr.bf16.mxu0 0
        %805 = vmatpush1.bf16.msra.mxu0 0
        %806 = vmatprep.subr.bf16.mxu0 0
        %807 = vmatpush1.bf16.msra.mxu0 0
        %808 = vmatprep.subr.bf16.mxu0 0
        %809 = vmatpush1.bf16.msra.mxu0 0
        %810 = vmatprep.subr.bf16.mxu0 0
        %811 = vmatpush1.bf16.msra.mxu0 0
        %812 = vmatprep.subr.bf16.mxu0 0
        %813 = vmatpush1.bf16.msra.mxu0 0
        %814 = vmatprep.subr.bf16.mxu0 0
        %815 = vmatpush1.bf16.msra.mxu0 0
        %816 = vmatprep.mubr.bf16.mxu0 0
        %817 = vmatmul.mubr.bf16.gmra.mrb[0].mxu0 %v778
        %v818 = vpop.f32.mrb[0].mxu0
        %v819 = vadd.f32 0.0, %v818
        %v820 = vpop.f32.mrb[0].mxu0
        %v821 = vpop.f32.mrb[0].mxu0
        %v822 = vpop.f32.mrb[0].mxu0
        %823 = vdwg.mxu0
        %824 = vst [vmem:[%s497] sm:$0xff] %v819
        %825 = vst.msk [vmem:[%s504] sm:$0xff] %vm763, %v774
        %s826 = sand.u32 %s263, 1
        %s827 = scalar_lea.sflag [#allocation6], %s826
        %s828 = sand.u32 %s263, 1
        %s829 = smul.addr %s828, 8
        %s830 = scalar_lea.vmem [#allocation13], %s829
        %s831 = sand.u32 %s291, 1
        %s832 = scalar_lea.sflag [#allocation15], %s831
        %s833 = sand.u32 %s291, 1
        %s834 = smul.addr %s833, 8
        %s835 = scalar_lea.vmem [#allocation14], %s834
        // Predicated region
        $region81: #{tpu_custom_call.1} parent=55 // pred_check
          %p836 = pneg %p273
        $region82: #{tpu_custom_call.1} parent=55 // pred_check_branch
          %838 = sbr.rel (%p836) target = $region84
        $region83: #{tpu_custom_call.1} parent=55 // pred_region
          %s840 = ssub.s32 128, 128
          %841 = vsyncadd %s827, %s840
          %s842 = sadd.s32 %s40, %s39
          %s843 = smul.addr %s842, 128
          %s844 = scalar_lea.hbm %s9, %s843
          %s846 = sshll.u32 %s830, 4
          %s847 = int_to_ptr.vmem [resolvable:$true] %s846
          %849 = dma.vmem_to_hbm [thread:$0]  %s847, 128, %s844, %s827
        $region84: #{tpu_custom_call.1} parent=55 // pred_fallthru
          _
        // Predicated region
        $region85: #{tpu_custom_call.1} parent=55 // pred_check
          %p850 = pneg %p301
        $region86: #{tpu_custom_call.1} parent=55 // pred_check_branch
          %852 = sbr.rel (%p850) target = $region88
        $region87: #{tpu_custom_call.1} parent=55 // pred_region
          %s854 = ssub.s32 128, 128
          %855 = vsyncadd %s832, %s854
          %s856 = sadd.s32 %s40, %s39
          %s857 = smul.addr %s856, 128
          %s858 = scalar_lea.hbm %s10, %s857
          %s860 = sshll.u32 %s835, 4
          %s861 = int_to_ptr.vmem [resolvable:$true] %s860
          %863 = dma.vmem_to_hbm [thread:$0]  %s861, 128, %s858, %s832
        $region88: #{tpu_custom_call.1} parent=55 // pred_fallthru
          _
      $region56: #{tpu_custom_call.1} parent=5 // pred_fallthru
        _
      %p864 = scmp.le.s32.totalorder 2, %s30
      // Predicated region
      $region89: #{tpu_custom_call.1} parent=5 // pred_check
        %p865 = pneg %p864
      $region90: #{tpu_custom_call.1} parent=5 // pred_check_branch
        %867 = sbr.rel (%p865) target = $region92
      $region91: #{tpu_custom_call.1} parent=5 // pred_region
        %s868 = ssub.s32 %s30, 2
        // Predicated region
        $region93: #{tpu_custom_call.1} parent=91 // pred_check
          %p869 = pneg %p279
        $region94: #{tpu_custom_call.1} parent=91 // pred_check_branch
          %871 = sbr.rel (%p869) target = $region96
        $region95: #{tpu_custom_call.1} parent=91 // pred_region
          %s872 = sand.u32 %s264, 1
          %s873 = scalar_lea.sflag [#allocation6], %s872
          %s874 = sand.u32 %s264, 1
          %s875 = smul.addr %s874, 8
          %s876 = scalar_lea.vmem [#allocation13], %s875
          %877 = dma.done %s873, 128
        $region96: #{tpu_custom_call.1} parent=91 // pred_fallthru
          _
        // Predicated region
        $region97: #{tpu_custom_call.1} parent=91 // pred_check
          %p878 = pneg %p307
        $region98: #{tpu_custom_call.1} parent=91 // pred_check_branch
          %880 = sbr.rel (%p878) target = $region100
        $region99: #{tpu_custom_call.1} parent=91 // pred_region
          %s881 = sand.u32 %s292, 1
          %s882 = scalar_lea.sflag [#allocation15], %s881
          %s883 = sand.u32 %s292, 1
          %s884 = smul.addr %s883, 8
          %s885 = scalar_lea.vmem [#allocation14], %s884
          %886 = dma.done %s882, 128
        $region100: #{tpu_custom_call.1} parent=91 // pred_fallthru
          _
      $region92: #{tpu_custom_call.1} parent=5 // pred_fallthru
        _
    $region6: #{tpu_custom_call.1} parent=1 // loop_footer
      %s34 = sadd.s32 1, %s30
    $region7: #{tpu_custom_call.1} parent=1 // loop_footer_branch
      %29 = sbr.rel target = $region3
    $region8: #{tpu_custom_call.1} parent=1 // loop_exit
      _
    %887 = vsyncpa [#allocation5], 1
    %s888 = scalar_lea.sflag [#allocation5], 1
    %889 = vsyncpa %s888, 1
    %890 = vsyncpa [#allocation8], 1
    %s891 = scalar_lea.sflag [#allocation8], 1
    %892 = vsyncpa %s891, 1
    %893 = vsyncpa [#allocation11], 1
    %894 = vsyncpa [#allocation6], 1
    %s895 = scalar_lea.sflag [#allocation6], 1
    %896 = vsyncpa %s895, 1
    %897 = vsyncpa [#allocation15], 1
    %s898 = scalar_lea.sflag [#allocation15], 1
    %899 = vsyncpa %s898, 1

</llo_original>
